<compile_context>
chip_gen: v7x
topology: tpu7x:2x2x1
jax: 0.10.0
libtpu: 0.0.40
codegen_flags: <defaults>
</compile_context>

<pallas_src>
import functools

import jax
import jax.numpy as jnp
import numpy as np
from jax.experimental import pallas as pl
from jax.experimental.pallas import tpu as pltpu

INPUT_SIZE = 1
OUTPUT_SIZE = 2
HIDDEN_LAYERS = 5
HIDDEN_NODES = 50
HIDDEN_PAD = 64           # 8-sublane grain; padded units have zero outgoing weights
MAX_TILE = 8192           # large enough to amortize per-step overhead; tiny VMEM cost


def _sigmoid(x):
    # sigmoid(x) = 0.5 * (tanh(x/2) + 1): one EUP transcendental per element
    # plus cheap VPU add/mul, instead of exp + divide.
    return 0.5 * (jnp.tanh(0.5 * x) + 1.0)


def odenet_kernel(t_ref, w_in_ref, b_in_ref, w_h_ref, b_h_ref,
                  w_out_ref, b_out_ref, out_ref):
    # Input layer: (H,1) * (1,TILE) + (H,1) -> (H,TILE) on the VPU
    # (a K=1 matmul would waste an MXU pass).
    h = _sigmoid(w_in_ref[...] * t_ref[...] + b_in_ref[...])

    # Hidden layers: the PyTorch ModuleList replicates the SAME Linear module,
    # so the same (W_h, b_h) is applied HIDDEN_LAYERS times.
    w_h = w_h_ref[...]
    b_h = b_h_ref[...]   # (H, 1): per-layer lane-splat add; a hoisted (H, TILE)
    #                      broadcast would spill at large tiles.
    for _ in range(HIDDEN_LAYERS):
        h = _sigmoid(jnp.dot(w_h, h, preferred_element_type=jnp.float32) + b_h)

    # Output layer: (2,H) @ (H,TILE) + (2,1) -> (2,TILE), lane-dense store.
    out = jnp.dot(w_out_ref[...], h,
                  preferred_element_type=jnp.float32) + b_out_ref[...]
    out_ref[...] = out.astype(out_ref.dtype)


def prepare_params(params):
    """One-time layout prep: transpose to feature-major and zero-pad the hidden
    dim 50 -> 64.  Padded hidden units evaluate to sigmoid(0)=0.5, but all of
    their OUTGOING weights are zero-padded, so the result is unchanged."""
    w_in, b_in, w_h, b_h, w_out, b_out = params
    hp = HIDDEN_PAD - HIDDEN_NODES
    w_in_t = jnp.pad(w_in.T.astype(jnp.float32), ((0, hp), (0, 0)))      # (64, 1)
    b_in_t = jnp.pad(b_in.T.astype(jnp.float32), ((0, hp), (0, 0)))      # (64, 1)
    w_h_t = jnp.pad(w_h.T.astype(jnp.float32), ((0, hp), (0, hp)))       # (64, 64)
    b_h_t = jnp.pad(b_h.T.astype(jnp.float32), ((0, hp), (0, 0)))        # (64, 1)
    w_out_t = jnp.pad(w_out.T.astype(jnp.float32), ((0, 0), (0, hp)))    # (2, 64)
    b_out_t = b_out.T.astype(jnp.float32)                                # (2, 1)
    return (w_in_t, b_in_t, w_h_t, b_h_t, w_out_t, b_out_t)


def _choose_tile(n, max_tile=MAX_TILE):
    """Lane-dense batch tile (multiple of 128), large to amortize per-step
    overhead, capped at n_pad/2 so >= 2 grid steps exist for v7x's 2 TCs."""
    n128 = ((n + 127) // 128) * 128
    tile = min(max_tile, n128)
    if n128 >= 256 and tile > n128 // 2:
        tile = max(128, ((n128 // 2) // 128) * 128)
    return tile


def odenet_forward(t, prepared_params, *, tile=None):
    """t: (N, 1) float32.  prepared_params: output of prepare_params.
    Returns [y1, y2], each shape (N,)."""
    w_in_t, b_in_t, w_h_t, b_h_t, w_out_t, b_out_t = prepared_params
    n = t.shape[0]

    if tile is None:
        tile = _choose_tile(n)
    assert tile % 128 == 0
    n_tiles = int(pl.cdiv(n, tile))
    n_pad = n_tiles * tile

    # (N,1) -> (1,N) is a pure reshape (no data movement); pad batch to tile grain.
    t_row = jnp.pad(t.astype(jnp.float32).reshape(1, n), ((0, 0), (0, n_pad - n)))

    def const_spec(shape):
        # Resident weights/biases: same block every grid step (DMA'd once).
        return pl.BlockSpec(shape, lambda i: (0, 0))

    out_t = pl.pallas_call(
        odenet_kernel,
        out_shape=jax.ShapeDtypeStruct((OUTPUT_SIZE, n_pad), jnp.float32),
        grid=(n_tiles,),
        in_specs=[
            pl.BlockSpec((1, tile), lambda i: (0, i)),          # t (lane-dense)
            const_spec((HIDDEN_PAD, 1)),                        # w_in^T (padded)
            const_spec((HIDDEN_PAD, 1)),                        # b_in^T
            const_spec((HIDDEN_PAD, HIDDEN_PAD)),               # w_h^T
            const_spec((HIDDEN_PAD, 1)),                        # b_h^T
            const_spec((OUTPUT_SIZE, HIDDEN_PAD)),              # w_out^T
            const_spec((OUTPUT_SIZE, 1)),                       # b_out^T
        ],
        out_specs=pl.BlockSpec((OUTPUT_SIZE, tile), lambda i: (0, i)),
        compiler_params=pltpu.CompilerParams(
            dimension_semantics=("parallel",),                  # v7x dual-TC sharding
            vmem_limit_bytes=32 * 1024 * 1024,                  # fits v7x 64 MiB VMEM
        ),
    )(t_row, w_in_t, b_in_t, w_h_t, b_h_t, w_out_t, b_out_t)

    out_t = out_t[:, :n]        # drop batch padding
    return [out_t[0], out_t[1]]


def init_params(key):
    """Deterministic init mimicking nn.Linear default (uniform +/- 1/sqrt(fan_in))."""
    k1, k2, k3, k4, k5, k6 = jax.random.split(key, 6)

    def uniform(k, shape, fan_in):
        bound = 1.0 / np.sqrt(fan_in)
        return jax.random.uniform(k, shape, jnp.float32, -bound, bound)

    w_in = uniform(k1, (INPUT_SIZE, HIDDEN_NODES), INPUT_SIZE)
    b_in = uniform(k2, (1, HIDDEN_NODES), INPUT_SIZE)
    w_h = uniform(k3, (HIDDEN_NODES, HIDDEN_NODES), HIDDEN_NODES)
    b_h = uniform(k4, (1, HIDDEN_NODES), HIDDEN_NODES)
    w_out = uniform(k5, (HIDDEN_NODES, OUTPUT_SIZE), HIDDEN_NODES)
    b_out = uniform(k6, (1, OUTPUT_SIZE), HIDDEN_NODES)
    return (w_in, b_in, w_h, b_h, w_out, b_out)


def reference_forward(t, params):
    w_in, b_in, w_h, b_h, w_out, b_out = params
    h = jax.nn.sigmoid(t @ w_in + b_in)
    for _ in range(HIDDEN_LAYERS):
        h = jax.nn.sigmoid(h @ w_h + b_h)
    out = h @ w_out + b_out
    return [out[:, 0], out[:, 1]]


if __name__ == "__main__":
    key = jax.random.PRNGKey(0)
    k_param, k_t1, k_t2 = jax.random.split(key, 3)

    params = init_params(k_param)
    prepared = prepare_params(params)           # one-time layout prep (hoisted)

    # jit the wrapper so the per-call pad/slice fuses with the pallas_call.
    fwd = jax.jit(functools.partial(odenet_forward, prepared_params=prepared))

    # Check 1: small N, not a tile multiple (exercises padding + multi-step grid).
    N1 = 300
    t1 = jax.random.uniform(k_t1, (N1, INPUT_SIZE), jnp.float32)
    y1a, y2a = fwd(t1)
    jax.block_until_ready(y1a); jax.block_until_ready(y2a)
    r1a, r2a = reference_forward(t1, params)
    np.testing.assert_allclose(np.asarray(y1a), np.asarray(r1a), rtol=2e-5, atol=2e-5)
    np.testing.assert_allclose(np.asarray(y2a), np.asarray(r2a), rtol=2e-5, atol=2e-5)

    # Check 2: larger N exercising the big-tile path (tile capped at n_pad/2 so
    # two grid steps remain for v7x dual-TC sharding).
    N2 = 4096
    t2 = jax.random.uniform(k_t2, (N2, INPUT_SIZE), jnp.float32)
    y1b, y2b = fwd(t2)
    jax.block_until_ready(y1b); jax.block_until_ready(y2b)
    r1b, r2b = reference_forward(t2, params)
    np.testing.assert_allclose(np.asarray(y1b), np.asarray(r1b), rtol=2e-5, atol=2e-5)
    np.testing.assert_allclose(np.asarray(y2b), np.asarray(r2b), rtol=2e-5, atol=2e-5)

    print("KERNEL_OK")
</pallas_src>

<mosaic_0001>
module attributes {stable_mosaic.version = 11 : i64} {
  func.func @odenet_kernel(%arg0: i32, %arg1: memref<1x128xf32, #tpu.memory_space<vmem>>, %arg2: memref<64x1xf32, #tpu.memory_space<vmem>>, %arg3: memref<64x1xf32, #tpu.memory_space<vmem>>, %arg4: memref<64x64xf32, #tpu.memory_space<vmem>>, %arg5: memref<64x1xf32, #tpu.memory_space<vmem>>, %arg6: memref<2x64xf32, #tpu.memory_space<vmem>>, %arg7: memref<2x1xf32, #tpu.memory_space<vmem>>, %arg8: memref<2x128xf32, #tpu.memory_space<vmem>>) attributes {dimension_semantics = [#tpu.dimension_semantics<parallel>], iteration_bounds = array<i64: 3>, scalar_prefetch = 0 : i64, scratch_operands = 0 : i64, tpu.core_type = #tpu.core_type<tc>, window_params = [{transform_indices = @transform_0, window_bounds = array<i64: 1, 128>}, {pipeline_mode = #tpu.pipeline_mode<synchronous>, transform_indices = @transform_1, window_bounds = array<i64: 64, 1>}, {pipeline_mode = #tpu.pipeline_mode<synchronous>, transform_indices = @transform_2, window_bounds = array<i64: 64, 1>}, {pipeline_mode = #tpu.pipeline_mode<synchronous>, transform_indices = @transform_3, window_bounds = array<i64: 64, 64>}, {pipeline_mode = #tpu.pipeline_mode<synchronous>, transform_indices = @transform_4, window_bounds = array<i64: 64, 1>}, {pipeline_mode = #tpu.pipeline_mode<synchronous>, transform_indices = @transform_5, window_bounds = array<i64: 2, 64>}, {pipeline_mode = #tpu.pipeline_mode<synchronous>, transform_indices = @transform_6, window_bounds = array<i64: 2, 1>}, {transform_indices = @transform_7, window_bounds = array<i64: 2, 128>}]} {
    %c0 = arith.constant 0 : index
    %c0_0 = arith.constant 0 : index
    %0 = vector.load %arg2[%c0, %c0_0] : memref<64x1xf32, #tpu.memory_space<vmem>>, vector<64x1xf32>
    %c0_1 = arith.constant 0 : index
    %c0_2 = arith.constant 0 : index
    %1 = vector.load %arg1[%c0_1, %c0_2] : memref<1x128xf32, #tpu.memory_space<vmem>>, vector<1x128xf32>
    %2 = vector.broadcast %0 : vector<64x1xf32> to vector<64x128xf32>
    %3 = vector.broadcast %1 : vector<1x128xf32> to vector<64x128xf32>
    %4 = arith.mulf %2, %3 : vector<64x128xf32>
    %c0_3 = arith.constant 0 : index
    %c0_4 = arith.constant 0 : index
    %5 = vector.load %arg3[%c0_3, %c0_4] : memref<64x1xf32, #tpu.memory_space<vmem>>, vector<64x1xf32>
    %6 = vector.broadcast %5 : vector<64x1xf32> to vector<64x128xf32>
    %7 = arith.addf %4, %6 : vector<64x128xf32>
    %cst = arith.constant 5.000000e-01 : f32
    %8 = vector.broadcast %cst : f32 to vector<64x128xf32>
    %9 = arith.mulf %8, %7 : vector<64x128xf32>
    %10 = math.tanh %9 : vector<64x128xf32>
    %cst_5 = arith.constant 1.000000e+00 : f32
    %11 = vector.broadcast %cst_5 : f32 to vector<64x128xf32>
    %12 = arith.addf %10, %11 : vector<64x128xf32>
    %cst_6 = arith.constant 5.000000e-01 : f32
    %13 = vector.broadcast %cst_6 : f32 to vector<64x128xf32>
    %14 = arith.mulf %13, %12 : vector<64x128xf32>
    %c0_7 = arith.constant 0 : index
    %c0_8 = arith.constant 0 : index
    %15 = vector.load %arg4[%c0_7, %c0_8] : memref<64x64xf32, #tpu.memory_space<vmem>>, vector<64x64xf32>
    %c0_9 = arith.constant 0 : index
    %c0_10 = arith.constant 0 : index
    %16 = vector.load %arg5[%c0_9, %c0_10] : memref<64x1xf32, #tpu.memory_space<vmem>>, vector<64x1xf32>
    %cst_11 = arith.constant dense<0.000000e+00> : vector<64x128xf32>
    %17 = tpu.matmul %15, %14, %cst_11 {dimension_numbers = #tpu.dot_dimension_numbers<[1], [0], [0], [1], [0, 0, 1, 1], [], []>} : vector<64x64xf32>, vector<64x128xf32>, vector<64x128xf32> -> vector<64x128xf32>
    %18 = vector.broadcast %16 : vector<64x1xf32> to vector<64x128xf32>
    %19 = arith.addf %17, %18 : vector<64x128xf32>
    %cst_12 = arith.constant 5.000000e-01 : f32
    %20 = vector.broadcast %cst_12 : f32 to vector<64x128xf32>
    %21 = arith.mulf %20, %19 : vector<64x128xf32>
    %22 = math.tanh %21 : vector<64x128xf32>
    %cst_13 = arith.constant 1.000000e+00 : f32
    %23 = vector.broadcast %cst_13 : f32 to vector<64x128xf32>
    %24 = arith.addf %22, %23 : vector<64x128xf32>
    %cst_14 = arith.constant 5.000000e-01 : f32
    %25 = vector.broadcast %cst_14 : f32 to vector<64x128xf32>
    %26 = arith.mulf %25, %24 : vector<64x128xf32>
    %cst_15 = arith.constant dense<0.000000e+00> : vector<64x128xf32>
    %27 = tpu.matmul %15, %26, %cst_15 {dimension_numbers = #tpu.dot_dimension_numbers<[1], [0], [0], [1], [0, 0, 1, 1], [], []>} : vector<64x64xf32>, vector<64x128xf32>, vector<64x128xf32> -> vector<64x128xf32>
    %28 = vector.broadcast %16 : vector<64x1xf32> to vector<64x128xf32>
    %29 = arith.addf %27, %28 : vector<64x128xf32>
    %cst_16 = arith.constant 5.000000e-01 : f32
    %30 = vector.broadcast %cst_16 : f32 to vector<64x128xf32>
    %31 = arith.mulf %30, %29 : vector<64x128xf32>
    %32 = math.tanh %31 : vector<64x128xf32>
    %cst_17 = arith.constant 1.000000e+00 : f32
    %33 = vector.broadcast %cst_17 : f32 to vector<64x128xf32>
    %34 = arith.addf %32, %33 : vector<64x128xf32>
    %cst_18 = arith.constant 5.000000e-01 : f32
    %35 = vector.broadcast %cst_18 : f32 to vector<64x128xf32>
    %36 = arith.mulf %35, %34 : vector<64x128xf32>
    %cst_19 = arith.constant dense<0.000000e+00> : vector<64x128xf32>
    %37 = tpu.matmul %15, %36, %cst_19 {dimension_numbers = #tpu.dot_dimension_numbers<[1], [0], [0], [1], [0, 0, 1, 1], [], []>} : vector<64x64xf32>, vector<64x128xf32>, vector<64x128xf32> -> vector<64x128xf32>
    %38 = vector.broadcast %16 : vector<64x1xf32> to vector<64x128xf32>
    %39 = arith.addf %37, %38 : vector<64x128xf32>
    %cst_20 = arith.constant 5.000000e-01 : f32
    %40 = vector.broadcast %cst_20 : f32 to vector<64x128xf32>
    %41 = arith.mulf %40, %39 : vector<64x128xf32>
    %42 = math.tanh %41 : vector<64x128xf32>
    %cst_21 = arith.constant 1.000000e+00 : f32
    %43 = vector.broadcast %cst_21 : f32 to vector<64x128xf32>
    %44 = arith.addf %42, %43 : vector<64x128xf32>
    %cst_22 = arith.constant 5.000000e-01 : f32
    %45 = vector.broadcast %cst_22 : f32 to vector<64x128xf32>
    %46 = arith.mulf %45, %44 : vector<64x128xf32>
    %cst_23 = arith.constant dense<0.000000e+00> : vector<64x128xf32>
    %47 = tpu.matmul %15, %46, %cst_23 {dimension_numbers = #tpu.dot_dimension_numbers<[1], [0], [0], [1], [0, 0, 1, 1], [], []>} : vector<64x64xf32>, vector<64x128xf32>, vector<64x128xf32> -> vector<64x128xf32>
    %48 = vector.broadcast %16 : vector<64x1xf32> to vector<64x128xf32>
    %49 = arith.addf %47, %48 : vector<64x128xf32>
    %cst_24 = arith.constant 5.000000e-01 : f32
    %50 = vector.broadcast %cst_24 : f32 to vector<64x128xf32>
    %51 = arith.mulf %50, %49 : vector<64x128xf32>
    %52 = math.tanh %51 : vector<64x128xf32>
    %cst_25 = arith.constant 1.000000e+00 : f32
    %53 = vector.broadcast %cst_25 : f32 to vector<64x128xf32>
    %54 = arith.addf %52, %53 : vector<64x128xf32>
    %cst_26 = arith.constant 5.000000e-01 : f32
    %55 = vector.broadcast %cst_26 : f32 to vector<64x128xf32>
    %56 = arith.mulf %55, %54 : vector<64x128xf32>
    %cst_27 = arith.constant dense<0.000000e+00> : vector<64x128xf32>
    %57 = tpu.matmul %15, %56, %cst_27 {dimension_numbers = #tpu.dot_dimension_numbers<[1], [0], [0], [1], [0, 0, 1, 1], [], []>} : vector<64x64xf32>, vector<64x128xf32>, vector<64x128xf32> -> vector<64x128xf32>
    %58 = vector.broadcast %16 : vector<64x1xf32> to vector<64x128xf32>
    %59 = arith.addf %57, %58 : vector<64x128xf32>
    %cst_28 = arith.constant 5.000000e-01 : f32
    %60 = vector.broadcast %cst_28 : f32 to vector<64x128xf32>
    %61 = arith.mulf %60, %59 : vector<64x128xf32>
    %62 = math.tanh %61 : vector<64x128xf32>
    %cst_29 = arith.constant 1.000000e+00 : f32
    %63 = vector.broadcast %cst_29 : f32 to vector<64x128xf32>
    %64 = arith.addf %62, %63 : vector<64x128xf32>
    %cst_30 = arith.constant 5.000000e-01 : f32
    %65 = vector.broadcast %cst_30 : f32 to vector<64x128xf32>
    %66 = arith.mulf %65, %64 : vector<64x128xf32>
    %c0_31 = arith.constant 0 : index
    %c0_32 = arith.constant 0 : index
    %67 = vector.load %arg6[%c0_31, %c0_32] : memref<2x64xf32, #tpu.memory_space<vmem>>, vector<2x64xf32>
    %cst_33 = arith.constant dense<0.000000e+00> : vector<2x128xf32>
    %68 = tpu.matmul %67, %66, %cst_33 {dimension_numbers = #tpu.dot_dimension_numbers<[1], [0], [0], [1], [0, 0, 1, 1], [], []>} : vector<2x64xf32>, vector<64x128xf32>, vector<2x128xf32> -> vector<2x128xf32>
    %c0_34 = arith.constant 0 : index
    %c0_35 = arith.constant 0 : index
    %69 = vector.load %arg7[%c0_34, %c0_35] : memref<2x1xf32, #tpu.memory_space<vmem>>, vector<2x1xf32>
    %70 = vector.broadcast %69 : vector<2x1xf32> to vector<2x128xf32>
    %71 = arith.addf %68, %70 : vector<2x128xf32>
    %c0_36 = arith.constant 0 : index
    %c0_37 = arith.constant 0 : index
    %72 = vector.load %arg8[%c0_36, %c0_37] : memref<2x128xf32, #tpu.memory_space<vmem>>, vector<2x128xf32>
    tpu.vector_store %arg8[%c0_36, %c0_37], %71 {strides = array<i32>} : memref<2x128xf32, #tpu.memory_space<vmem>>, vector<2x128xf32>,
    return
  }
  func.func @transform_0(%arg0: i32) -> (i32, i32) {
    %c0_i32 = arith.constant 0 : i32
    %c0_i32_0 = arith.constant 0 : i32
    return %c0_i32, %arg0 : i32, i32
  }
  func.func @transform_1(%arg0: i32) -> (i32, i32) {
    %c0_i32 = arith.constant 0 : i32
    %c0_i32_0 = arith.constant 0 : i32
    %c0_i32_1 = arith.constant 0 : i32
    return %c0_i32, %c0_i32_0 : i32, i32
  }
  func.func @transform_2(%arg0: i32) -> (i32, i32) {
    %c0_i32 = arith.constant 0 : i32
    %c0_i32_0 = arith.constant 0 : i32
    %c0_i32_1 = arith.constant 0 : i32
    return %c0_i32, %c0_i32_0 : i32, i32
  }
  func.func @transform_3(%arg0: i32) -> (i32, i32) {
    %c0_i32 = arith.constant 0 : i32
    %c0_i32_0 = arith.constant 0 : i32
    %c0_i32_1 = arith.constant 0 : i32
    return %c0_i32, %c0_i32_0 : i32, i32
  }
  func.func @transform_4(%arg0: i32) -> (i32, i32) {
    %c0_i32 = arith.constant 0 : i32
    %c0_i32_0 = arith.constant 0 : i32
    %c0_i32_1 = arith.constant 0 : i32
    return %c0_i32, %c0_i32_0 : i32, i32
  }
  func.func @transform_5(%arg0: i32) -> (i32, i32) {
    %c0_i32 = arith.constant 0 : i32
    %c0_i32_0 = arith.constant 0 : i32
    %c0_i32_1 = arith.constant 0 : i32
    return %c0_i32, %c0_i32_0 : i32, i32
  }
  func.func @transform_6(%arg0: i32) -> (i32, i32) {
    %c0_i32 = arith.constant 0 : i32
    %c0_i32_0 = arith.constant 0 : i32
    %c0_i32_1 = arith.constant 0 : i32
    return %c0_i32, %c0_i32_0 : i32, i32
  }
  func.func @transform_7(%arg0: i32) -> (i32, i32) {
    %c0_i32 = arith.constant 0 : i32
    %c0_i32_0 = arith.constant 0 : i32
    return %c0_i32, %arg0 : i32, i32
  }
}

</mosaic_0001>

<llo_original>
// kernel: odenet_forward.1
$region0: #{odenet_forward.1}
  #allocation0 [shape = 'u32[]', space=smem, size = 0x4, offset = 0x4, fixed_abs, tag = 'smem constant byte address 0x4 - core index']
  #allocation1 [shape = 'u32[144,128]{1,0:T(1,128)}', space=vmem, size = 0x12000, scoped, tag = 'internal scratch']
  %s0 = inlined_call_operand.vmem [shape: f32[1,384], index: 0, kind: input, shape index: {}]
  %s1 = inlined_call_operand.hbm [shape: f32[64,1], index: 1, kind: input, shape index: {}]
  %s2 = inlined_call_operand.hbm [shape: f32[64,1], index: 2, kind: input, shape index: {}]
  %s3 = inlined_call_operand.hbm [shape: f32[64,64], index: 3, kind: input, shape index: {}]
  %s4 = inlined_call_operand.hbm [shape: f32[64,1], index: 4, kind: input, shape index: {}]
  %s5 = inlined_call_operand.vmem [shape: f32[2,64], index: 5, kind: input, shape index: {}]
  %s6 = inlined_call_operand.vmem [shape: f32[2,1], index: 6, kind: input, shape index: {}]
  %s7 = inlined_call_operand.vmem [shape: f32[2,384], index: 7, kind: output, shape index: {}]
  %s8 = sld [smem:[#allocation0]]
  $region77: #{odenet_forward.1} parent=0
    _
  %s10 = ssub.s32 1, %s8
  %s11 = scalar_select 0, %s10, %s8
  $region1: #{odenet_forward.1} parent=0
    #allocation2 [shape = 'u8[32768]{0}', space=vmem, size = 0x8000, scoped, tag = 'input window, operand 1, single buffered']
    #allocation3 [shape = 's32[2]{0}', space=sflag, size = 0x8, scoped, tag = 'scoped memory for odenet_forward.1']
    #allocation4 [shape = 'u8[32768]{0}', space=vmem, size = 0x8000, scoped, tag = 'input window, operand 2, single buffered']
    #allocation5 [shape = 's32[1]{0}', space=sflag, size = 0x4, scoped, tag = 'scoped memory for odenet_forward.1']
    #allocation6 [shape = 'u8[32768]{0}', space=vmem, size = 0x8000, scoped, tag = 'input window, operand 3, single buffered']
    #allocation7 [shape = 'u8[32768]{0}', space=vmem, size = 0x8000, scoped, tag = 'input window, operand 4, single buffered']
    #allocation8 [shape = 's32[1]{0}', space=sflag, size = 0x4, scoped, tag = 'scoped memory for odenet_forward.1']
    %12 = vsyncpa [#allocation3], 0
    %13 = vsyncpa [#allocation5], 0
    %14 = vsyncpa [#allocation8], 0
    loop: start=0, step=1, limit=5
    $region2: #{odenet_forward.1} parent=1 // loop_pre_header
      _
    $region3: #{odenet_forward.1} parent=1 // loop_header
      %s16 = sphi 0, %s20
      %p17 = scmp.ge.s32.totalorder %s16, 5
      %s26 = sphi 0, %s28
      %s29 = sphi 0, %s26
      %s30 = sphi 0, %s29
      %s46 = sphi 0, %s30
      %s50 = sphi 0, %s50
      %s52 = sphi 0, %s50
      %s53 = sphi 0, %s52
      %s67 = sphi 0, %s53
      %s71 = sphi 0, %s71
      %s73 = sphi 0, %s71
      %s74 = sphi 0, %s73
      %s88 = sphi 0, %s74
      %s92 = sphi 0, %s92
      %s94 = sphi 0, %s92
      %s95 = sphi 0, %s94
      %s109 = sphi 0, %s95
      %s113 = sphi 0, %s113
      %s115 = sphi 0, %s113
      %s116 = sphi 0, %s115
      %s130 = sphi 0, %s116
      %s134 = sphi 0, %s134
      %s136 = sphi 0, %s134
      %s137 = sphi 0, %s136
      %s151 = sphi 0, %s137
      %s155 = sphi 0, %s155
      %s157 = sphi 0, %s155
      %s158 = sphi 0, %s157
      %s172 = sphi 0, %s158
      %s178 = sphi 0, %s180
      %s181 = sphi 0, %s178
      %s182 = sphi 0, %s181
      %s198 = sphi 0, %s182
    $region4: #{odenet_forward.1} parent=1 // loop_header_branch
      %19 = sbr.rel (%p17) target = $region8
    $region5: #{odenet_forward.1} parent=1 // loop_body
      %s21 = ssub.s32 %s16, 1
      %s22 = ssub.s32 %s16, 2
      %s23 = sadd.s32 %s16, 1
      %s24 = ssub.s32 %s16, %s23
      %p25 = scmp.eq.s32.totalorder %s24, 0
      %s27 = sadd.s32 %s26, 1
      %s28 = scalar_select %p25, %s26, %s27
      %p31 = pneg %p25
      %p32 = scmp.eq.s32.totalorder %s16, 2
      %p33 = por %p31, %p32
      %p34 = scmp.ne.s32.totalorder %s26, %s29
      %p35 = scmp.eq.s32.totalorder %s16, 0
      %p36 = por %p34, %p35
      %p37 = scmp.ne.s32.totalorder %s26, %s29
      %p38 = scmp.eq.s32.totalorder %s21, 2
      %p39 = por %p37, %p38
      %p40 = scmp.ne.s32.totalorder %s29, %s30
      %p41 = scmp.eq.s32.totalorder %s21, 0
      %p42 = por %p40, %p41
      %p43 = scmp.ne.s32.totalorder %s29, %s30
      %p44 = scmp.eq.s32.totalorder %s22, 2
      %p45 = por %p43, %p44
      %p47 = scmp.ne.s32.totalorder %s30, %s46
      %p48 = scmp.eq.s32.totalorder %s22, 0
      %p49 = por %p47, %p48
      %s51 = sadd.s32 %s50, 1
      %p54 = scmp.eq.s32.totalorder %s16, 2
      %p55 = scmp.ne.s32.totalorder %s50, %s52
      %p56 = scmp.eq.s32.totalorder %s16, 0
      %p57 = por %p55, %p56
      %p58 = scmp.ne.s32.totalorder %s50, %s52
      %p59 = scmp.eq.s32.totalorder %s21, 2
      %p60 = por %p58, %p59
      %p61 = scmp.ne.s32.totalorder %s52, %s53
      %p62 = scmp.eq.s32.totalorder %s21, 0
      %p63 = por %p61, %p62
      %p64 = scmp.ne.s32.totalorder %s52, %s53
      %p65 = scmp.eq.s32.totalorder %s22, 2
      %p66 = por %p64, %p65
      %p68 = scmp.ne.s32.totalorder %s53, %s67
      %p69 = scmp.eq.s32.totalorder %s22, 0
      %p70 = por %p68, %p69
      %s72 = sadd.s32 %s71, 1
      %p75 = scmp.eq.s32.totalorder %s16, 2
      %p76 = scmp.ne.s32.totalorder %s71, %s73
      %p77 = scmp.eq.s32.totalorder %s16, 0
      %p78 = por %p76, %p77
      %p79 = scmp.ne.s32.totalorder %s71, %s73
      %p80 = scmp.eq.s32.totalorder %s21, 2
      %p81 = por %p79, %p80
      %p82 = scmp.ne.s32.totalorder %s73, %s74
      %p83 = scmp.eq.s32.totalorder %s21, 0
      %p84 = por %p82, %p83
      %p85 = scmp.ne.s32.totalorder %s73, %s74
      %p86 = scmp.eq.s32.totalorder %s22, 2
      %p87 = por %p85, %p86
      %p89 = scmp.ne.s32.totalorder %s74, %s88
      %p90 = scmp.eq.s32.totalorder %s22, 0
      %p91 = por %p89, %p90
      %s93 = sadd.s32 %s92, 1
      %p96 = scmp.eq.s32.totalorder %s16, 2
      %p97 = scmp.ne.s32.totalorder %s92, %s94
      %p98 = scmp.eq.s32.totalorder %s16, 0
      %p99 = por %p97, %p98
      %p100 = scmp.ne.s32.totalorder %s92, %s94
      %p101 = scmp.eq.s32.totalorder %s21, 2
      %p102 = por %p100, %p101
      %p103 = scmp.ne.s32.totalorder %s94, %s95
      %p104 = scmp.eq.s32.totalorder %s21, 0
      %p105 = por %p103, %p104
      %p106 = scmp.ne.s32.totalorder %s94, %s95
      %p107 = scmp.eq.s32.totalorder %s22, 2
      %p108 = por %p106, %p107
      %p110 = scmp.ne.s32.totalorder %s95, %s109
      %p111 = scmp.eq.s32.totalorder %s22, 0
      %p112 = por %p110, %p111
      %s114 = sadd.s32 %s113, 1
      %p117 = scmp.eq.s32.totalorder %s16, 2
      %p118 = scmp.ne.s32.totalorder %s113, %s115
      %p119 = scmp.eq.s32.totalorder %s16, 0
      %p120 = por %p118, %p119
      %p121 = scmp.ne.s32.totalorder %s113, %s115
      %p122 = scmp.eq.s32.totalorder %s21, 2
      %p123 = por %p121, %p122
      %p124 = scmp.ne.s32.totalorder %s115, %s116
      %p125 = scmp.eq.s32.totalorder %s21, 0
      %p126 = por %p124, %p125
      %p127 = scmp.ne.s32.totalorder %s115, %s116
      %p128 = scmp.eq.s32.totalorder %s22, 2
      %p129 = por %p127, %p128
      %p131 = scmp.ne.s32.totalorder %s116, %s130
      %p132 = scmp.eq.s32.totalorder %s22, 0
      %p133 = por %p131, %p132
      %s135 = sadd.s32 %s134, 1
      %p138 = scmp.eq.s32.totalorder %s16, 2
      %p139 = scmp.ne.s32.totalorder %s134, %s136
      %p140 = scmp.eq.s32.totalorder %s16, 0
      %p141 = por %p139, %p140
      %p142 = scmp.ne.s32.totalorder %s134, %s136
      %p143 = scmp.eq.s32.totalorder %s21, 2
      %p144 = por %p142, %p143
      %p145 = scmp.ne.s32.totalorder %s136, %s137
      %p146 = scmp.eq.s32.totalorder %s21, 0
      %p147 = por %p145, %p146
      %p148 = scmp.ne.s32.totalorder %s136, %s137
      %p149 = scmp.eq.s32.totalorder %s22, 2
      %p150 = por %p148, %p149
      %p152 = scmp.ne.s32.totalorder %s137, %s151
      %p153 = scmp.eq.s32.totalorder %s22, 0
      %p154 = por %p152, %p153
      %s156 = sadd.s32 %s155, 1
      %p159 = scmp.eq.s32.totalorder %s16, 2
      %p160 = scmp.ne.s32.totalorder %s155, %s157
      %p161 = scmp.eq.s32.totalorder %s16, 0
      %p162 = por %p160, %p161
      %p163 = scmp.ne.s32.totalorder %s155, %s157
      %p164 = scmp.eq.s32.totalorder %s21, 2
      %p165 = por %p163, %p164
      %p166 = scmp.ne.s32.totalorder %s157, %s158
      %p167 = scmp.eq.s32.totalorder %s21, 0
      %p168 = por %p166, %p167
      %p169 = scmp.ne.s32.totalorder %s157, %s158
      %p170 = scmp.eq.s32.totalorder %s22, 2
      %p171 = por %p169, %p170
      %p173 = scmp.ne.s32.totalorder %s158, %s172
      %p174 = scmp.eq.s32.totalorder %s22, 0
      %p175 = por %p173, %p174
      %s176 = ssub.s32 %s16, %s23
      %p177 = scmp.eq.s32.totalorder %s176, 0
      %s179 = sadd.s32 %s178, 1
      %s180 = scalar_select %p177, %s178, %s179
      %p183 = pneg %p177
      %p184 = scmp.eq.s32.totalorder %s16, 2
      %p185 = por %p183, %p184
      %p186 = scmp.ne.s32.totalorder %s178, %s181
      %p187 = scmp.eq.s32.totalorder %s16, 0
      %p188 = por %p186, %p187
      %p189 = scmp.ne.s32.totalorder %s178, %s181
      %p190 = scmp.eq.s32.totalorder %s21, 2
      %p191 = por %p189, %p190
      %p192 = scmp.ne.s32.totalorder %s181, %s182
      %p193 = scmp.eq.s32.totalorder %s21, 0
      %p194 = por %p192, %p193
      %p195 = scmp.ne.s32.totalorder %s181, %s182
      %p196 = scmp.eq.s32.totalorder %s22, 2
      %p197 = por %p195, %p196
      %p199 = scmp.ne.s32.totalorder %s182, %s198
      %p200 = scmp.eq.s32.totalorder %s22, 0
      %p201 = por %p199, %p200
      %p202 = scmp.le.s32.totalorder 1, %s16
      %p203 = scmp.lt.s32.totalorder %s16, 4
      %p204 = pnand %p202, %p203
      %p205 = pneg %p204
      // Predicated region
      $region9: #{odenet_forward.1} parent=5 // pred_check
        _
      $region10: #{odenet_forward.1} parent=5 // pred_check_branch
        %207 = sbr.rel (%p204) target = $region12
      $region11: #{odenet_forward.1} parent=5 // pred_region
        %s208 = ssub.s32 %s16, 1
        // Predicated region
        $region13: #{odenet_forward.1} parent=11 // pred_check
          %p209 = pneg %p63
        $region14: #{odenet_forward.1} parent=11 // pred_check_branch
          %211 = sbr.rel (%p209) target = $region16
        $region15: #{odenet_forward.1} parent=11 // pred_region
          %s213 = ssub.s32 1024, 1024
          %214 = vsyncadd [#allocation3], %s213
          %s215 = sshll.u32 [#allocation2], 4
          %s216 = int_to_ptr.vmem [resolvable:$true] %s215
          %221 = dma.hbm_to_vmem [thread:$0]  %s1, 1024, %s216, [#allocation3], 128, 128, 8
        $region16: #{odenet_forward.1} parent=11 // pred_fallthru
          _
        // Predicated region
        $region17: #{odenet_forward.1} parent=11 // pred_check
          %p222 = pneg %p84
        $region18: #{odenet_forward.1} parent=11 // pred_check_branch
          %224 = sbr.rel (%p222) target = $region20
        $region19: #{odenet_forward.1} parent=11 // pred_region
          %s226 = ssub.s32 1024, 1024
          %227 = vsyncadd [#allocation5], %s226
          %s228 = sshll.u32 [#allocation4], 4
          %s229 = int_to_ptr.vmem [resolvable:$true] %s228
          %234 = dma.hbm_to_vmem [thread:$0]  %s2, 1024, %s229, [#allocation5], 128, 128, 8
        $region20: #{odenet_forward.1} parent=11 // pred_fallthru
          _
        // Predicated region
        $region21: #{odenet_forward.1} parent=11 // pred_check
          %p235 = pneg %p105
        $region22: #{odenet_forward.1} parent=11 // pred_check_branch
          %237 = sbr.rel (%p235) target = $region24
        $region23: #{odenet_forward.1} parent=11 // pred_region
          %s239 = ssub.s32 1024, 1024
          %240 = vsyncadd [#allocation5], %s239
          %s241 = sshll.u32 [#allocation6], 4
          %s242 = int_to_ptr.vmem [resolvable:$true] %s241
          %247 = dma.hbm_to_vmem [thread:$0]  %s3, 1024, %s242, [#allocation5], 128, 128, 8
        $region24: #{odenet_forward.1} parent=11 // pred_fallthru
          _
        // Predicated region
        $region25: #{odenet_forward.1} parent=11 // pred_check
          %p248 = pneg %p126
        $region26: #{odenet_forward.1} parent=11 // pred_check_branch
          %250 = sbr.rel (%p248) target = $region28
        $region27: #{odenet_forward.1} parent=11 // pred_region
          %s252 = ssub.s32 1024, 1024
          %253 = vsyncadd [#allocation8], %s252
          %s254 = sshll.u32 [#allocation7], 4
          %s255 = int_to_ptr.vmem [resolvable:$true] %s254
          %260 = dma.hbm_to_vmem [thread:$0]  %s4, 1024, %s255, [#allocation8], 128, 128, 8
        $region28: #{odenet_forward.1} parent=11 // pred_fallthru
          _
        // Predicated region
        $region29: #{odenet_forward.1} parent=11 // pred_check
          %p261 = pneg %p147
        $region30: #{odenet_forward.1} parent=11 // pred_check_branch
          %263 = sbr.rel (%p261) target = $region32
        $region31: #{odenet_forward.1} parent=11 // pred_region
          _
        $region32: #{odenet_forward.1} parent=11 // pred_fallthru
          _
        // Predicated region
        $region33: #{odenet_forward.1} parent=11 // pred_check
          %p264 = pneg %p168
        $region34: #{odenet_forward.1} parent=11 // pred_check_branch
          %266 = sbr.rel (%p264) target = $region36
        $region35: #{odenet_forward.1} parent=11 // pred_region
          _
        $region36: #{odenet_forward.1} parent=11 // pred_fallthru
          _
      $region12: #{odenet_forward.1} parent=5 // pred_fallthru
        _
      %p267 = scmp.lt.s32.totalorder %s16, 3
      // Predicated region
      $region37: #{odenet_forward.1} parent=5 // pred_check
        %p268 = pneg %p267
      $region38: #{odenet_forward.1} parent=5 // pred_check_branch
        %270 = sbr.rel (%p268) target = $region40
      $region39: #{odenet_forward.1} parent=5 // pred_region
        // Predicated region
        $region41: #{odenet_forward.1} parent=39 // pred_check
          %p271 = pneg %p36
        $region42: #{odenet_forward.1} parent=39 // pred_check_branch
          %273 = sbr.rel (%p271) target = $region44
        $region43: #{odenet_forward.1} parent=39 // pred_region
          %p274 = scmp.lt.s32.totalorder %s16, 2
          %s275 = scalar_select %p274, %s16, 2
          %s276 = scalar_lea.vmem %s0, %s275
        $region44: #{odenet_forward.1} parent=39 // pred_fallthru
          _
      $region40: #{odenet_forward.1} parent=5 // pred_fallthru
        _
      %p277 = scmp.le.s32.totalorder 1, %s16
      %p278 = scmp.lt.s32.totalorder %s16, 4
      %p279 = pnand %p277, %p278
      %p280 = pneg %p279
      // Predicated region
      $region45: #{odenet_forward.1} parent=5 // pred_check
        _
      $region46: #{odenet_forward.1} parent=5 // pred_check_branch
        %282 = sbr.rel (%p279) target = $region48
      $region47: #{odenet_forward.1} parent=5 // pred_region
        %s283 = ssub.s32 %s16, 1
        // Predicated region
        $region49: #{odenet_forward.1} parent=47 // pred_check
          %p284 = pneg %p63
        $region50: #{odenet_forward.1} parent=47 // pred_check_branch
          %286 = sbr.rel (%p284) target = $region52
        $region51: #{odenet_forward.1} parent=47 // pred_region
          %287 = dma.done [#allocation3], 1024
        $region52: #{odenet_forward.1} parent=47 // pred_fallthru
          _
        // Predicated region
        $region53: #{odenet_forward.1} parent=47 // pred_check
          %p288 = pneg %p84
        $region54: #{odenet_forward.1} parent=47 // pred_check_branch
          %290 = sbr.rel (%p288) target = $region56
        $region55: #{odenet_forward.1} parent=47 // pred_region
          %291 = dma.done [#allocation5], 1024
        $region56: #{odenet_forward.1} parent=47 // pred_fallthru
          _
        // Predicated region
        $region57: #{odenet_forward.1} parent=47 // pred_check
          %p292 = pneg %p105
        $region58: #{odenet_forward.1} parent=47 // pred_check_branch
          %294 = sbr.rel (%p292) target = $region60
        $region59: #{odenet_forward.1} parent=47 // pred_region
          %295 = dma.done [#allocation5], 1024
        $region60: #{odenet_forward.1} parent=47 // pred_fallthru
          _
        // Predicated region
        $region61: #{odenet_forward.1} parent=47 // pred_check
          %p296 = pneg %p126
        $region62: #{odenet_forward.1} parent=47 // pred_check_branch
          %298 = sbr.rel (%p296) target = $region64
        $region63: #{odenet_forward.1} parent=47 // pred_region
          %299 = dma.done [#allocation8], 1024
        $region64: #{odenet_forward.1} parent=47 // pred_fallthru
          _
        %p300 = scmp.lt.s32.totalorder %s21, 2
        %s301 = scalar_select %p300, %s21, 2
        %s302 = scalar_lea.vmem %s0, %s301
        %p303 = pneg %p42
        %p304 = pneg %p39
        %p305 = pneg %p63
        %p306 = pneg %p60
        %p307 = pneg %p84
        %p308 = pneg %p81
        %p309 = pneg %p105
        %p310 = pneg %p102
        %p311 = pneg %p126
        %p312 = pneg %p123
        %p313 = pneg %p147
        %p314 = pneg %p144
        %p315 = pneg %p168
        %p316 = pneg %p165
        %p317 = pneg %p194
        %p318 = pneg %p191
        %p319 = scmp.lt.s32.totalorder %s21, 2
        %s320 = scalar_select %p319, %s21, 2
        %s321 = smul.addr %s320, 2
        %s322 = scalar_lea.vmem %s7, %s321
        %p323 = scmp.lt.s32.totalorder %s21, 2
        %s324 = scalar_select %p323, %s21, 2
        %s325 = scalar_lea.vmem %s0, %s324
        %p326 = scmp.lt.s32.totalorder %s21, 2
        %s327 = scalar_select %p326, %s21, 2
        %s328 = smul.addr %s327, 2
        %s329 = scalar_lea.vmem %s7, %s328
        %v330 = vld [vmem:[#allocation2] sm:$0xff]
        %v331 = vld [vmem:[#allocation2 + $0x8] sm:$0xff]
        %v332 = vld [vmem:[#allocation2 + $0x10] sm:$0xff]
        %v333 = vld [vmem:[#allocation2 + $0x18] sm:$0xff]
        %v334 = vld [vmem:[#allocation2 + $0x20] sm:$0xff]
        %v335 = vld [vmem:[#allocation2 + $0x28] sm:$0xff]
        %v336 = vld [vmem:[#allocation2 + $0x30] sm:$0xff]
        %v337 = vld [vmem:[#allocation2 + $0x38] sm:$0xff]
        %v338 = vld [vmem:[%s325] sm:$0x1]
        %340 = vset.pattern.permute.xlu0 0
        %341 = vperm.xlu0 %340, %v330
        %v342 = vpop.permute.xlu0 %341
        %345 = vset.pattern.permute.xlu0 0
        %346 = vperm.xlu0 %345, %v331
        %v347 = vpop.permute.xlu0 %346
        %350 = vset.pattern.permute.xlu0 0
        %351 = vperm.xlu0 %350, %v332
        %v352 = vpop.permute.xlu0 %351
        %355 = vset.pattern.permute.xlu0 0
        %356 = vperm.xlu0 %355, %v333
        %v357 = vpop.permute.xlu0 %356
        %360 = vset.pattern.permute.xlu0 0
        %361 = vperm.xlu0 %360, %v334
        %v362 = vpop.permute.xlu0 %361
        %365 = vset.pattern.permute.xlu0 0
        %366 = vperm.xlu0 %365, %v335
        %v367 = vpop.permute.xlu0 %366
        %370 = vset.pattern.permute.xlu0 0
        %371 = vperm.xlu0 %370, %v336
        %v372 = vpop.permute.xlu0 %371
        %375 = vset.pattern.permute.xlu0 0
        %376 = vperm.xlu0 %375, %v337
        %v377 = vpop.permute.xlu0 %376
        %v380 = vlaneseq
        %v381 = vshrl.u32 %v380, 7
        %v382 = vsub.s32 0, %v381
        %v383 = vrot.slane %v338, %v382
        %v385 = vmul.f32 %v342, %v383
        %v386 = vmul.f32 %v347, %v383
        %v387 = vmul.f32 %v352, %v383
        %v388 = vmul.f32 %v357, %v383
        %v389 = vmul.f32 %v362, %v383
        %v390 = vmul.f32 %v367, %v383
        %v391 = vmul.f32 %v372, %v383
        %v392 = vmul.f32 %v377, %v383
        %v393 = vld [vmem:[#allocation4] sm:$0xff]
        %v394 = vld [vmem:[#allocation4 + $0x8] sm:$0xff]
        %v395 = vld [vmem:[#allocation4 + $0x10] sm:$0xff]
        %v396 = vld [vmem:[#allocation4 + $0x18] sm:$0xff]
        %v397 = vld [vmem:[#allocation4 + $0x20] sm:$0xff]
        %v398 = vld [vmem:[#allocation4 + $0x28] sm:$0xff]
        %v399 = vld [vmem:[#allocation4 + $0x30] sm:$0xff]
        %v400 = vld [vmem:[#allocation4 + $0x38] sm:$0xff]
        %402 = vset.pattern.permute.xlu0 0
        %403 = vperm.xlu0 %402, %v393
        %v404 = vpop.permute.xlu0 %403
        %407 = vset.pattern.permute.xlu0 0
        %408 = vperm.xlu0 %407, %v394
        %v409 = vpop.permute.xlu0 %408
        %412 = vset.pattern.permute.xlu0 0
        %413 = vperm.xlu0 %412, %v395
        %v414 = vpop.permute.xlu0 %413
        %417 = vset.pattern.permute.xlu0 0
        %418 = vperm.xlu0 %417, %v396
        %v419 = vpop.permute.xlu0 %418
        %422 = vset.pattern.permute.xlu0 0
        %423 = vperm.xlu0 %422, %v397
        %v424 = vpop.permute.xlu0 %423
        %427 = vset.pattern.permute.xlu0 0
        %428 = vperm.xlu0 %427, %v398
        %v429 = vpop.permute.xlu0 %428
        %432 = vset.pattern.permute.xlu0 0
        %433 = vperm.xlu0 %432, %v399
        %v434 = vpop.permute.xlu0 %433
        %437 = vset.pattern.permute.xlu0 0
        %438 = vperm.xlu0 %437, %v400
        %v439 = vpop.permute.xlu0 %438
        %v441 = vadd.f32 %v385, %v404
        %v442 = vadd.f32 %v386, %v409
        %v443 = vadd.f32 %v387, %v414
        %v444 = vadd.f32 %v388, %v419
        %v445 = vadd.f32 %v389, %v424
        %v446 = vadd.f32 %v390, %v429
        %v447 = vadd.f32 %v391, %v434
        %v448 = vadd.f32 %v392, %v439
        %v449 = vmul.f32 %v441, 0.5
        %v450 = vmul.f32 %v442, 0.5
        %v451 = vmul.f32 %v443, 0.5
        %v452 = vmul.f32 %v444, 0.5
        %v453 = vmul.f32 %v445, 0.5
        %v454 = vmul.f32 %v446, 0.5
        %v455 = vmul.f32 %v447, 0.5
        %v456 = vmul.f32 %v448, 0.5
        %v457 = vtanh.pop %v449
        %v458 = vtanh.pop %v450
        %v459 = vtanh.pop %v451
        %v460 = vtanh.pop %v452
        %v461 = vtanh.pop %v453
        %v462 = vtanh.pop %v454
        %v463 = vtanh.pop %v455
        %v464 = vtanh.pop %v456
        %v465 = vadd.f32 %v457, 1.0
        %v466 = vadd.f32 %v458, 1.0
        %v467 = vadd.f32 %v459, 1.0
        %v468 = vadd.f32 %v460, 1.0
        %v469 = vadd.f32 %v461, 1.0
        %v470 = vadd.f32 %v462, 1.0
        %v471 = vadd.f32 %v463, 1.0
        %v472 = vadd.f32 %v464, 1.0
        %v473 = vmul.f32 %v465, 0.5
        %v474 = vmul.f32 %v466, 0.5
        %v475 = vmul.f32 %v467, 0.5
        %v476 = vmul.f32 %v468, 0.5
        %v477 = vmul.f32 %v469, 0.5
        %v478 = vmul.f32 %v470, 0.5
        %v479 = vmul.f32 %v471, 0.5
        %v480 = vmul.f32 %v472, 0.5
        %v481 = vld [vmem:[#allocation6] sm:$0xff]
        %v482 = vld [vmem:[#allocation6 + $0x8] sm:$0xff]
        %v483 = vld [vmem:[#allocation6 + $0x10] sm:$0xff]
        %v484 = vld [vmem:[#allocation6 + $0x18] sm:$0xff]
        %v485 = vld [vmem:[#allocation6 + $0x20] sm:$0xff]
        %v486 = vld [vmem:[#allocation6 + $0x28] sm:$0xff]
        %v487 = vld [vmem:[#allocation6 + $0x30] sm:$0xff]
        %v488 = vld [vmem:[#allocation6 + $0x38] sm:$0xff]
        %v489 = vld [vmem:[#allocation7] sm:$0xff]
        %v490 = vld [vmem:[#allocation7 + $0x8] sm:$0xff]
        %v491 = vld [vmem:[#allocation7 + $0x10] sm:$0xff]
        %v492 = vld [vmem:[#allocation7 + $0x18] sm:$0xff]
        %v493 = vld [vmem:[#allocation7 + $0x20] sm:$0xff]
        %v494 = vld [vmem:[#allocation7 + $0x28] sm:$0xff]
        %v495 = vld [vmem:[#allocation7 + $0x30] sm:$0xff]
        %v496 = vld [vmem:[#allocation7 + $0x38] sm:$0xff]
        %498 = vset.pattern.permute.xlu0 0
        %499 = vperm.xlu0 %498, %v489
        %v500 = vpop.permute.xlu0 %499
        %503 = vset.pattern.permute.xlu0 0
        %504 = vperm.xlu0 %503, %v490
        %v505 = vpop.permute.xlu0 %504
        %508 = vset.pattern.permute.xlu0 0
        %509 = vperm.xlu0 %508, %v491
        %v510 = vpop.permute.xlu0 %509
        %513 = vset.pattern.permute.xlu0 0
        %514 = vperm.xlu0 %513, %v492
        %v515 = vpop.permute.xlu0 %514
        %518 = vset.pattern.permute.xlu0 0
        %519 = vperm.xlu0 %518, %v493
        %v520 = vpop.permute.xlu0 %519
        %523 = vset.pattern.permute.xlu0 0
        %524 = vperm.xlu0 %523, %v494
        %v525 = vpop.permute.xlu0 %524
        %528 = vset.pattern.permute.xlu0 0
        %529 = vperm.xlu0 %528, %v495
        %v530 = vpop.permute.xlu0 %529
        %533 = vset.pattern.permute.xlu0 0
        %534 = vperm.xlu0 %533, %v496
        %v535 = vpop.permute.xlu0 %534
        %vm537 = vcmask 523264
        %v539 = vsel %vm537, %v481, 0
        %v542 = vsel %vm537, %v482, 0
        %v545 = vsel %vm537, %v483, 0
        %v548 = vsel %vm537, %v484, 0
        %v551 = vsel %vm537, %v485, 0
        %v554 = vsel %vm537, %v486, 0
        %v557 = vsel %vm537, %v487, 0
        %v560 = vsel %vm537, %v488, 0
        %562 = vmatprep.subr.mxu0 0.0
        %563 = vmatpush1.msra.mxu0 %v473
        %564 = vmatprep.subr.mxu0 0.0
        %565 = vmatpush1.msra.mxu0 %v474
        %566 = vmatprep.subr.mxu0 0.0
        %567 = vmatpush1.msra.mxu0 %v475
        %568 = vmatprep.subr.mxu0 0.0
        %569 = vmatpush1.msra.mxu0 %v476
        %570 = vmatprep.subr.mxu0 0.0
        %571 = vmatpush1.msra.mxu0 %v477
        %572 = vmatprep.subr.mxu0 0.0
        %573 = vmatpush1.msra.mxu0 %v478
        %574 = vmatprep.subr.mxu0 0.0
        %575 = vmatpush1.msra.mxu0 %v479
        %576 = vmatprep.subr.mxu0 0.0
        %577 = vmatpush1.msra.mxu0 %v480
        %578 = vmatprep.subr.mxu0 0.0
        %579 = vmatpush1.msra.mxu0 0.0
        %580 = vmatprep.subr.mxu0 0.0
        %581 = vmatpush1.msra.mxu0 0.0
        %582 = vmatprep.subr.mxu0 0.0
        %583 = vmatpush1.msra.mxu0 0.0
        %584 = vmatprep.subr.mxu0 0.0
        %585 = vmatpush1.msra.mxu0 0.0
        %586 = vmatprep.subr.mxu0 0.0
        %587 = vmatpush1.msra.mxu0 0.0
        %588 = vmatprep.subr.mxu0 0.0
        %589 = vmatpush1.msra.mxu0 0.0
        %590 = vmatprep.subr.mxu0 0.0
        %591 = vmatpush1.msra.mxu0 0.0
        %592 = vmatprep.subr.mxu0 0.0
        %593 = vmatpush1.msra.mxu0 0.0
        %594 = vmatprep.subr.mxu0 0.0
        %595 = vmatpush1.msra.mxu0 0.0
        %596 = vmatprep.subr.mxu0 0.0
        %597 = vmatpush1.msra.mxu0 0.0
        %598 = vmatprep.subr.mxu0 0.0
        %599 = vmatpush1.msra.mxu0 0.0
        %600 = vmatprep.subr.mxu0 0.0
        %601 = vmatpush1.msra.mxu0 0.0
        %602 = vmatprep.subr.mxu0 0.0
        %603 = vmatpush1.msra.mxu0 0.0
        %604 = vmatprep.subr.mxu0 0.0
        %605 = vmatpush1.msra.mxu0 0.0
        %606 = vmatprep.subr.mxu0 0.0
        %607 = vmatpush1.msra.mxu0 0.0
        %608 = vmatprep.subr.mxu0 0.0
        %609 = vmatpush1.msra.mxu0 0.0
        %610 = vmatprep.subr.mxu0 0.0
        %611 = vmatpush1.msra.mxu0 0.0
        %612 = vmatprep.subr.mxu0 0.0
        %613 = vmatpush1.msra.mxu0 0.0
        %614 = vmatprep.subr.mxu0 0.0
        %615 = vmatpush1.msra.mxu0 0.0
        %616 = vmatprep.subr.mxu0 0.0
        %617 = vmatpush1.msra.mxu0 0.0
        %618 = vmatprep.subr.mxu0 0.0
        %619 = vmatpush1.msra.mxu0 0.0
        %620 = vmatprep.subr.mxu0 0.0
        %621 = vmatpush1.msra.mxu0 0.0
        %622 = vmatprep.subr.mxu0 0.0
        %623 = vmatpush1.msra.mxu0 0.0
        %624 = vmatprep.subr.mxu0 0.0
        %625 = vmatpush1.msra.mxu0 0.0
        %626 = vmatprep.mubr.f32.mxu0 0.0
        %627 = vmatmul.mubr.f32.gmra.mrb[0].mxu0 %v539
        %v628 = vpop.f32.mrb[0].mxu0
        %v629 = vadd.f32 %v500, %v628
        %v630 = vpop.f32.mrb[0].mxu0
        %631 = vmatprep.mubr.f32.mxu0 0.0
        %632 = vmatmul.mubr.f32.gmra.mrb[0].mxu0 %v542
        %v633 = vpop.f32.mrb[0].mxu0
        %v634 = vadd.f32 %v505, %v633
        %v635 = vpop.f32.mrb[0].mxu0
        %636 = vmatprep.mubr.f32.mxu0 0.0
        %637 = vmatmul.mubr.f32.gmra.mrb[0].mxu0 %v545
        %v638 = vpop.f32.mrb[0].mxu0
        %v639 = vadd.f32 %v510, %v638
        %v640 = vpop.f32.mrb[0].mxu0
        %641 = vmatprep.mubr.f32.mxu0 0.0
        %642 = vmatmul.mubr.f32.gmra.mrb[0].mxu0 %v548
        %v643 = vpop.f32.mrb[0].mxu0
        %v644 = vadd.f32 %v515, %v643
        %v645 = vpop.f32.mrb[0].mxu0
        %646 = vmatprep.mubr.f32.mxu0 0.0
        %647 = vmatmul.mubr.f32.gmra.mrb[0].mxu0 %v551
        %v648 = vpop.f32.mrb[0].mxu0
        %v649 = vadd.f32 %v520, %v648
        %v650 = vpop.f32.mrb[0].mxu0
        %651 = vmatprep.mubr.f32.mxu0 0.0
        %652 = vmatmul.mubr.f32.gmra.mrb[0].mxu0 %v554
        %v653 = vpop.f32.mrb[0].mxu0
        %v654 = vadd.f32 %v525, %v653
        %v655 = vpop.f32.mrb[0].mxu0
        %656 = vmatprep.mubr.f32.mxu0 0.0
        %657 = vmatmul.mubr.f32.gmra.mrb[0].mxu0 %v557
        %v658 = vpop.f32.mrb[0].mxu0
        %v659 = vadd.f32 %v530, %v658
        %v660 = vpop.f32.mrb[0].mxu0
        %661 = vmatprep.mubr.f32.mxu0 0.0
        %662 = vmatmul.mubr.f32.gmra.mrb[0].mxu0 %v560
        %v663 = vpop.f32.mrb[0].mxu0
        %v664 = vadd.f32 %v535, %v663
        %v665 = vpop.f32.mrb[0].mxu0
        %666 = vdwg.mxu0
        %v667 = vmul.f32 %v629, 0.5
        %v668 = vmul.f32 %v634, 0.5
        %v669 = vmul.f32 %v639, 0.5
        %v670 = vmul.f32 %v644, 0.5
        %v671 = vmul.f32 %v649, 0.5
        %v672 = vmul.f32 %v654, 0.5
        %v673 = vmul.f32 %v659, 0.5
        %v674 = vmul.f32 %v664, 0.5
        %v675 = vtanh.pop %v667
        %v676 = vtanh.pop %v668
        %v677 = vtanh.pop %v669
        %v678 = vtanh.pop %v670
        %v679 = vtanh.pop %v671
        %v680 = vtanh.pop %v672
        %v681 = vtanh.pop %v673
        %v682 = vtanh.pop %v674
        %v683 = vadd.f32 %v675, 1.0
        %v684 = vadd.f32 %v676, 1.0
        %v685 = vadd.f32 %v677, 1.0
        %v686 = vadd.f32 %v678, 1.0
        %v687 = vadd.f32 %v679, 1.0
        %v688 = vadd.f32 %v680, 1.0
        %v689 = vadd.f32 %v681, 1.0
        %v690 = vadd.f32 %v682, 1.0
        %v691 = vmul.f32 %v683, 0.5
        %v692 = vmul.f32 %v684, 0.5
        %v693 = vmul.f32 %v685, 0.5
        %v694 = vmul.f32 %v686, 0.5
        %v695 = vmul.f32 %v687, 0.5
        %v696 = vmul.f32 %v688, 0.5
        %v697 = vmul.f32 %v689, 0.5
        %v698 = vmul.f32 %v690, 0.5
        %699 = vmatprep.subr.mxu0 0.0
        %700 = vmatpush1.msra.mxu0 %v691
        %701 = vmatprep.subr.mxu0 0.0
        %702 = vmatpush1.msra.mxu0 %v692
        %703 = vmatprep.subr.mxu0 0.0
        %704 = vmatpush1.msra.mxu0 %v693
        %705 = vmatprep.subr.mxu0 0.0
        %706 = vmatpush1.msra.mxu0 %v694
        %707 = vmatprep.subr.mxu0 0.0
        %708 = vmatpush1.msra.mxu0 %v695
        %709 = vmatprep.subr.mxu0 0.0
        %710 = vmatpush1.msra.mxu0 %v696
        %711 = vmatprep.subr.mxu0 0.0
        %712 = vmatpush1.msra.mxu0 %v697
        %713 = vmatprep.subr.mxu0 0.0
        %714 = vmatpush1.msra.mxu0 %v698
        %715 = vmatprep.subr.mxu0 0.0
        %716 = vmatpush1.msra.mxu0 0.0
        %717 = vmatprep.subr.mxu0 0.0
        %718 = vmatpush1.msra.mxu0 0.0
        %719 = vmatprep.subr.mxu0 0.0
        %720 = vmatpush1.msra.mxu0 0.0
        %721 = vmatprep.subr.mxu0 0.0
        %722 = vmatpush1.msra.mxu0 0.0
        %723 = vmatprep.subr.mxu0 0.0
        %724 = vmatpush1.msra.mxu0 0.0
        %725 = vmatprep.subr.mxu0 0.0
        %726 = vmatpush1.msra.mxu0 0.0
        %727 = vmatprep.subr.mxu0 0.0
        %728 = vmatpush1.msra.mxu0 0.0
        %729 = vmatprep.subr.mxu0 0.0
        %730 = vmatpush1.msra.mxu0 0.0
        %731 = vmatprep.subr.mxu0 0.0
        %732 = vmatpush1.msra.mxu0 0.0
        %733 = vmatprep.subr.mxu0 0.0
        %734 = vmatpush1.msra.mxu0 0.0
        %735 = vmatprep.subr.mxu0 0.0
        %736 = vmatpush1.msra.mxu0 0.0
        %737 = vmatprep.subr.mxu0 0.0
        %738 = vmatpush1.msra.mxu0 0.0
        %739 = vmatprep.subr.mxu0 0.0
        %740 = vmatpush1.msra.mxu0 0.0
        %741 = vmatprep.subr.mxu0 0.0
        %742 = vmatpush1.msra.mxu0 0.0
        %743 = vmatprep.subr.mxu0 0.0
        %744 = vmatpush1.msra.mxu0 0.0
        %745 = vmatprep.subr.mxu0 0.0
        %746 = vmatpush1.msra.mxu0 0.0
        %747 = vmatprep.subr.mxu0 0.0
        %748 = vmatpush1.msra.mxu0 0.0
        %749 = vmatprep.subr.mxu0 0.0
        %750 = vmatpush1.msra.mxu0 0.0
        %751 = vmatprep.subr.mxu0 0.0
        %752 = vmatpush1.msra.mxu0 0.0
        %753 = vmatprep.subr.mxu0 0.0
        %754 = vmatpush1.msra.mxu0 0.0
        %755 = vmatprep.subr.mxu0 0.0
        %756 = vmatpush1.msra.mxu0 0.0
        %757 = vmatprep.subr.mxu0 0.0
        %758 = vmatpush1.msra.mxu0 0.0
        %759 = vmatprep.subr.mxu0 0.0
        %760 = vmatpush1.msra.mxu0 0.0
        %761 = vmatprep.subr.mxu0 0.0
        %762 = vmatpush1.msra.mxu0 0.0
        %763 = vmatprep.mubr.f32.mxu0 0.0
        %764 = vmatmul.mubr.f32.gmra.mrb[0].mxu0 %v539
        %v765 = vpop.f32.mrb[0].mxu0
        %v766 = vadd.f32 %v500, %v765
        %v767 = vpop.f32.mrb[0].mxu0
        %768 = vmatprep.mubr.f32.mxu0 0.0
        %769 = vmatmul.mubr.f32.gmra.mrb[0].mxu0 %v542
        %v770 = vpop.f32.mrb[0].mxu0
        %v771 = vadd.f32 %v505, %v770
        %v772 = vpop.f32.mrb[0].mxu0
        %773 = vmatprep.mubr.f32.mxu0 0.0
        %774 = vmatmul.mubr.f32.gmra.mrb[0].mxu0 %v545
        %v775 = vpop.f32.mrb[0].mxu0
        %v776 = vadd.f32 %v510, %v775
        %v777 = vpop.f32.mrb[0].mxu0
        %778 = vmatprep.mubr.f32.mxu0 0.0
        %779 = vmatmul.mubr.f32.gmra.mrb[0].mxu0 %v548
        %v780 = vpop.f32.mrb[0].mxu0
        %v781 = vadd.f32 %v515, %v780
        %v782 = vpop.f32.mrb[0].mxu0
        %783 = vmatprep.mubr.f32.mxu0 0.0
        %784 = vmatmul.mubr.f32.gmra.mrb[0].mxu0 %v551
        %v785 = vpop.f32.mrb[0].mxu0
        %v786 = vadd.f32 %v520, %v785
        %v787 = vpop.f32.mrb[0].mxu0
        %788 = vmatprep.mubr.f32.mxu0 0.0
        %789 = vmatmul.mubr.f32.gmra.mrb[0].mxu0 %v554
        %v790 = vpop.f32.mrb[0].mxu0
        %v791 = vadd.f32 %v525, %v790
        %v792 = vpop.f32.mrb[0].mxu0
        %793 = vmatprep.mubr.f32.mxu0 0.0
        %794 = vmatmul.mubr.f32.gmra.mrb[0].mxu0 %v557
        %v795 = vpop.f32.mrb[0].mxu0
        %v796 = vadd.f32 %v530, %v795
        %v797 = vpop.f32.mrb[0].mxu0
        %798 = vmatprep.mubr.f32.mxu0 0.0
        %799 = vmatmul.mubr.f32.gmra.mrb[0].mxu0 %v560
        %v800 = vpop.f32.mrb[0].mxu0
        %v801 = vadd.f32 %v535, %v800
        %v802 = vpop.f32.mrb[0].mxu0
        %803 = vdwg.mxu0
        %v804 = vmul.f32 %v766, 0.5
        %v805 = vmul.f32 %v771, 0.5
        %v806 = vmul.f32 %v776, 0.5
        %v807 = vmul.f32 %v781, 0.5
        %v808 = vmul.f32 %v786, 0.5
        %v809 = vmul.f32 %v791, 0.5
        %v810 = vmul.f32 %v796, 0.5
        %v811 = vmul.f32 %v801, 0.5
        %v812 = vtanh.pop %v804
        %v813 = vtanh.pop %v805
        %v814 = vtanh.pop %v806
        %v815 = vtanh.pop %v807
        %v816 = vtanh.pop %v808
        %v817 = vtanh.pop %v809
        %v818 = vtanh.pop %v810
        %v819 = vtanh.pop %v811
        %v820 = vadd.f32 %v812, 1.0
        %v821 = vadd.f32 %v813, 1.0
        %v822 = vadd.f32 %v814, 1.0
        %v823 = vadd.f32 %v815, 1.0
        %v824 = vadd.f32 %v816, 1.0
        %v825 = vadd.f32 %v817, 1.0
        %v826 = vadd.f32 %v818, 1.0
        %v827 = vadd.f32 %v819, 1.0
        %v828 = vmul.f32 %v820, 0.5
        %v829 = vmul.f32 %v821, 0.5
        %v830 = vmul.f32 %v822, 0.5
        %v831 = vmul.f32 %v823, 0.5
        %v832 = vmul.f32 %v824, 0.5
        %v833 = vmul.f32 %v825, 0.5
        %v834 = vmul.f32 %v826, 0.5
        %v835 = vmul.f32 %v827, 0.5
        %836 = vmatprep.subr.mxu0 0.0
        %837 = vmatpush1.msra.mxu0 %v828
        %838 = vmatprep.subr.mxu0 0.0
        %839 = vmatpush1.msra.mxu0 %v829
        %840 = vmatprep.subr.mxu0 0.0
        %841 = vmatpush1.msra.mxu0 %v830
        %842 = vmatprep.subr.mxu0 0.0
        %843 = vmatpush1.msra.mxu0 %v831
        %844 = vmatprep.subr.mxu0 0.0
        %845 = vmatpush1.msra.mxu0 %v832
        %846 = vmatprep.subr.mxu0 0.0
        %847 = vmatpush1.msra.mxu0 %v833
        %848 = vmatprep.subr.mxu0 0.0
        %849 = vmatpush1.msra.mxu0 %v834
        %850 = vmatprep.subr.mxu0 0.0
        %851 = vmatpush1.msra.mxu0 %v835
        %852 = vmatprep.subr.mxu0 0.0
        %853 = vmatpush1.msra.mxu0 0.0
        %854 = vmatprep.subr.mxu0 0.0
        %855 = vmatpush1.msra.mxu0 0.0
        %856 = vmatprep.subr.mxu0 0.0
        %857 = vmatpush1.msra.mxu0 0.0
        %858 = vmatprep.subr.mxu0 0.0
        %859 = vmatpush1.msra.mxu0 0.0
        %860 = vmatprep.subr.mxu0 0.0
        %861 = vmatpush1.msra.mxu0 0.0
        %862 = vmatprep.subr.mxu0 0.0
        %863 = vmatpush1.msra.mxu0 0.0
        %864 = vmatprep.subr.mxu0 0.0
        %865 = vmatpush1.msra.mxu0 0.0
        %866 = vmatprep.subr.mxu0 0.0
        %867 = vmatpush1.msra.mxu0 0.0
        %868 = vmatprep.subr.mxu0 0.0
        %869 = vmatpush1.msra.mxu0 0.0
        %870 = vmatprep.subr.mxu0 0.0
        %871 = vmatpush1.msra.mxu0 0.0
        %872 = vmatprep.subr.mxu0 0.0
        %873 = vmatpush1.msra.mxu0 0.0
        %874 = vmatprep.subr.mxu0 0.0
        %875 = vmatpush1.msra.mxu0 0.0
        %876 = vmatprep.subr.mxu0 0.0
        %877 = vmatpush1.msra.mxu0 0.0
        %878 = vmatprep.subr.mxu0 0.0
        %879 = vmatpush1.msra.mxu0 0.0
        %880 = vmatprep.subr.mxu0 0.0
        %881 = vmatpush1.msra.mxu0 0.0
        %882 = vmatprep.subr.mxu0 0.0
        %883 = vmatpush1.msra.mxu0 0.0
        %884 = vmatprep.subr.mxu0 0.0
        %885 = vmatpush1.msra.mxu0 0.0
        %886 = vmatprep.subr.mxu0 0.0
        %887 = vmatpush1.msra.mxu0 0.0
        %888 = vmatprep.subr.mxu0 0.0
        %889 = vmatpush1.msra.mxu0 0.0
        %890 = vmatprep.subr.mxu0 0.0
        %891 = vmatpush1.msra.mxu0 0.0
        %892 = vmatprep.subr.mxu0 0.0
        %893 = vmatpush1.msra.mxu0 0.0
        %894 = vmatprep.subr.mxu0 0.0
        %895 = vmatpush1.msra.mxu0 0.0
        %896 = vmatprep.subr.mxu0 0.0
        %897 = vmatpush1.msra.mxu0 0.0
        %898 = vmatprep.subr.mxu0 0.0
        %899 = vmatpush1.msra.mxu0 0.0
        %900 = vmatprep.mubr.f32.mxu0 0.0
        %901 = vmatmul.mubr.f32.gmra.mrb[0].mxu0 %v539
        %v902 = vpop.f32.mrb[0].mxu0
        %v903 = vadd.f32 %v500, %v902
        %v904 = vpop.f32.mrb[0].mxu0
        %905 = vmatprep.mubr.f32.mxu0 0.0
        %906 = vmatmul.mubr.f32.gmra.mrb[0].mxu0 %v542
        %v907 = vpop.f32.mrb[0].mxu0
        %v908 = vadd.f32 %v505, %v907
        %v909 = vpop.f32.mrb[0].mxu0
        %910 = vmatprep.mubr.f32.mxu0 0.0
        %911 = vmatmul.mubr.f32.gmra.mrb[0].mxu0 %v545
        %v912 = vpop.f32.mrb[0].mxu0
        %v913 = vadd.f32 %v510, %v912
        %v914 = vpop.f32.mrb[0].mxu0
        %915 = vmatprep.mubr.f32.mxu0 0.0
        %916 = vmatmul.mubr.f32.gmra.mrb[0].mxu0 %v548
        %v917 = vpop.f32.mrb[0].mxu0
        %v918 = vadd.f32 %v515, %v917
        %v919 = vpop.f32.mrb[0].mxu0
        %920 = vmatprep.mubr.f32.mxu0 0.0
        %921 = vmatmul.mubr.f32.gmra.mrb[0].mxu0 %v551
        %v922 = vpop.f32.mrb[0].mxu0
        %v923 = vadd.f32 %v520, %v922
        %v924 = vpop.f32.mrb[0].mxu0
        %925 = vmatprep.mubr.f32.mxu0 0.0
        %926 = vmatmul.mubr.f32.gmra.mrb[0].mxu0 %v554
        %v927 = vpop.f32.mrb[0].mxu0
        %v928 = vadd.f32 %v525, %v927
        %v929 = vpop.f32.mrb[0].mxu0
        %930 = vmatprep.mubr.f32.mxu0 0.0
        %931 = vmatmul.mubr.f32.gmra.mrb[0].mxu0 %v557
        %v932 = vpop.f32.mrb[0].mxu0
        %v933 = vadd.f32 %v530, %v932
        %v934 = vpop.f32.mrb[0].mxu0
        %935 = vmatprep.mubr.f32.mxu0 0.0
        %936 = vmatmul.mubr.f32.gmra.mrb[0].mxu0 %v560
        %v937 = vpop.f32.mrb[0].mxu0
        %v938 = vadd.f32 %v535, %v937
        %v939 = vpop.f32.mrb[0].mxu0
        %940 = vdwg.mxu0
        %v941 = vmul.f32 %v903, 0.5
        %v942 = vmul.f32 %v908, 0.5
        %v943 = vmul.f32 %v913, 0.5
        %v944 = vmul.f32 %v918, 0.5
        %v945 = vmul.f32 %v923, 0.5
        %v946 = vmul.f32 %v928, 0.5
        %v947 = vmul.f32 %v933, 0.5
        %v948 = vmul.f32 %v938, 0.5
        %v949 = vtanh.pop %v941
        %v950 = vtanh.pop %v942
        %v951 = vtanh.pop %v943
        %v952 = vtanh.pop %v944
        %v953 = vtanh.pop %v945
        %v954 = vtanh.pop %v946
        %v955 = vtanh.pop %v947
        %v956 = vtanh.pop %v948
        %v957 = vadd.f32 %v949, 1.0
        %v958 = vadd.f32 %v950, 1.0
        %v959 = vadd.f32 %v951, 1.0
        %v960 = vadd.f32 %v952, 1.0
        %v961 = vadd.f32 %v953, 1.0
        %v962 = vadd.f32 %v954, 1.0
        %v963 = vadd.f32 %v955, 1.0
        %v964 = vadd.f32 %v956, 1.0
        %v965 = vmul.f32 %v957, 0.5
        %v966 = vmul.f32 %v958, 0.5
        %v967 = vmul.f32 %v959, 0.5
        %v968 = vmul.f32 %v960, 0.5
        %v969 = vmul.f32 %v961, 0.5
        %v970 = vmul.f32 %v962, 0.5
        %v971 = vmul.f32 %v963, 0.5
        %v972 = vmul.f32 %v964, 0.5
        %973 = vmatprep.subr.mxu0 0.0
        %974 = vmatpush1.msra.mxu0 %v965
        %975 = vmatprep.subr.mxu0 0.0
        %976 = vmatpush1.msra.mxu0 %v966
        %977 = vmatprep.subr.mxu0 0.0
        %978 = vmatpush1.msra.mxu0 %v967
        %979 = vmatprep.subr.mxu0 0.0
        %980 = vmatpush1.msra.mxu0 %v968
        %981 = vmatprep.subr.mxu0 0.0
        %982 = vmatpush1.msra.mxu0 %v969
        %983 = vmatprep.subr.mxu0 0.0
        %984 = vmatpush1.msra.mxu0 %v970
        %985 = vmatprep.subr.mxu0 0.0
        %986 = vmatpush1.msra.mxu0 %v971
        %987 = vmatprep.subr.mxu0 0.0
        %988 = vmatpush1.msra.mxu0 %v972
        %989 = vmatprep.subr.mxu0 0.0
        %990 = vmatpush1.msra.mxu0 0.0
        %991 = vmatprep.subr.mxu0 0.0
        %992 = vmatpush1.msra.mxu0 0.0
        %993 = vmatprep.subr.mxu0 0.0
        %994 = vmatpush1.msra.mxu0 0.0
        %995 = vmatprep.subr.mxu0 0.0
        %996 = vmatpush1.msra.mxu0 0.0
        %997 = vmatprep.subr.mxu0 0.0
        %998 = vmatpush1.msra.mxu0 0.0
        %999 = vmatprep.subr.mxu0 0.0
        %1000 = vmatpush1.msra.mxu0 0.0
        %1001 = vmatprep.subr.mxu0 0.0
        %1002 = vmatpush1.msra.mxu0 0.0
        %1003 = vmatprep.subr.mxu0 0.0
        %1004 = vmatpush1.msra.mxu0 0.0
        %1005 = vmatprep.subr.mxu0 0.0
        %1006 = vmatpush1.msra.mxu0 0.0
        %1007 = vmatprep.subr.mxu0 0.0
        %1008 = vmatpush1.msra.mxu0 0.0
        %1009 = vmatprep.subr.mxu0 0.0
        %1010 = vmatpush1.msra.mxu0 0.0
        %1011 = vmatprep.subr.mxu0 0.0
        %1012 = vmatpush1.msra.mxu0 0.0
        %1013 = vmatprep.subr.mxu0 0.0
        %1014 = vmatpush1.msra.mxu0 0.0
        %1015 = vmatprep.subr.mxu0 0.0
        %1016 = vmatpush1.msra.mxu0 0.0
        %1017 = vmatprep.subr.mxu0 0.0
        %1018 = vmatpush1.msra.mxu0 0.0
        %1019 = vmatprep.subr.mxu0 0.0
        %1020 = vmatpush1.msra.mxu0 0.0
        %1021 = vmatprep.subr.mxu0 0.0
        %1022 = vmatpush1.msra.mxu0 0.0
        %1023 = vmatprep.subr.mxu0 0.0
        %1024 = vmatpush1.msra.mxu0 0.0
        %1025 = vmatprep.subr.mxu0 0.0
        %1026 = vmatpush1.msra.mxu0 0.0
        %1027 = vmatprep.subr.mxu0 0.0
        %1028 = vmatpush1.msra.mxu0 0.0
        %1029 = vmatprep.subr.mxu0 0.0
        %1030 = vmatpush1.msra.mxu0 0.0
        %1031 = vmatprep.subr.mxu0 0.0
        %1032 = vmatpush1.msra.mxu0 0.0
        %1033 = vmatprep.subr.mxu0 0.0
        %1034 = vmatpush1.msra.mxu0 0.0
        %1035 = vmatprep.subr.mxu0 0.0
        %1036 = vmatpush1.msra.mxu0 0.0
        %1037 = vmatprep.mubr.f32.mxu0 0.0
        %1038 = vmatmul.mubr.f32.gmra.mrb[0].mxu0 %v539
        %v1039 = vpop.f32.mrb[0].mxu0
        %v1040 = vadd.f32 %v500, %v1039
        %v1041 = vpop.f32.mrb[0].mxu0
        %1042 = vmatprep.mubr.f32.mxu0 0.0
        %1043 = vmatmul.mubr.f32.gmra.mrb[0].mxu0 %v542
        %v1044 = vpop.f32.mrb[0].mxu0
        %v1045 = vadd.f32 %v505, %v1044
        %v1046 = vpop.f32.mrb[0].mxu0
        %1047 = vmatprep.mubr.f32.mxu0 0.0
        %1048 = vmatmul.mubr.f32.gmra.mrb[0].mxu0 %v545
        %v1049 = vpop.f32.mrb[0].mxu0
        %v1050 = vadd.f32 %v510, %v1049
        %v1051 = vpop.f32.mrb[0].mxu0
        %1052 = vmatprep.mubr.f32.mxu0 0.0
        %1053 = vmatmul.mubr.f32.gmra.mrb[0].mxu0 %v548
        %v1054 = vpop.f32.mrb[0].mxu0
        %v1055 = vadd.f32 %v515, %v1054
        %v1056 = vpop.f32.mrb[0].mxu0
        %1057 = vmatprep.mubr.f32.mxu0 0.0
        %1058 = vmatmul.mubr.f32.gmra.mrb[0].mxu0 %v551
        %v1059 = vpop.f32.mrb[0].mxu0
        %v1060 = vadd.f32 %v520, %v1059
        %v1061 = vpop.f32.mrb[0].mxu0
        %1062 = vmatprep.mubr.f32.mxu0 0.0
        %1063 = vmatmul.mubr.f32.gmra.mrb[0].mxu0 %v554
        %v1064 = vpop.f32.mrb[0].mxu0
        %v1065 = vadd.f32 %v525, %v1064
        %v1066 = vpop.f32.mrb[0].mxu0
        %1067 = vmatprep.mubr.f32.mxu0 0.0
        %1068 = vmatmul.mubr.f32.gmra.mrb[0].mxu0 %v557
        %v1069 = vpop.f32.mrb[0].mxu0
        %v1070 = vadd.f32 %v530, %v1069
        %v1071 = vpop.f32.mrb[0].mxu0
        %1072 = vmatprep.mubr.f32.mxu0 0.0
        %1073 = vmatmul.mubr.f32.gmra.mrb[0].mxu0 %v560
        %v1074 = vpop.f32.mrb[0].mxu0
        %v1075 = vadd.f32 %v535, %v1074
        %v1076 = vpop.f32.mrb[0].mxu0
        %1077 = vdwg.mxu0
        %v1078 = vmul.f32 %v1040, 0.5
        %v1079 = vmul.f32 %v1045, 0.5
        %v1080 = vmul.f32 %v1050, 0.5
        %v1081 = vmul.f32 %v1055, 0.5
        %v1082 = vmul.f32 %v1060, 0.5
        %v1083 = vmul.f32 %v1065, 0.5
        %v1084 = vmul.f32 %v1070, 0.5
        %v1085 = vmul.f32 %v1075, 0.5
        %v1086 = vtanh.pop %v1078
        %v1087 = vtanh.pop %v1079
        %v1088 = vtanh.pop %v1080
        %v1089 = vtanh.pop %v1081
        %v1090 = vtanh.pop %v1082
        %v1091 = vtanh.pop %v1083
        %v1092 = vtanh.pop %v1084
        %v1093 = vtanh.pop %v1085
        %v1094 = vadd.f32 %v1086, 1.0
        %v1095 = vadd.f32 %v1087, 1.0
        %v1096 = vadd.f32 %v1088, 1.0
        %v1097 = vadd.f32 %v1089, 1.0
        %v1098 = vadd.f32 %v1090, 1.0
        %v1099 = vadd.f32 %v1091, 1.0
        %v1100 = vadd.f32 %v1092, 1.0
        %v1101 = vadd.f32 %v1093, 1.0
        %v1102 = vmul.f32 %v1094, 0.5
        %v1103 = vmul.f32 %v1095, 0.5
        %v1104 = vmul.f32 %v1096, 0.5
        %v1105 = vmul.f32 %v1097, 0.5
        %v1106 = vmul.f32 %v1098, 0.5
        %v1107 = vmul.f32 %v1099, 0.5
        %v1108 = vmul.f32 %v1100, 0.5
        %v1109 = vmul.f32 %v1101, 0.5
        %1110 = vmatprep.subr.mxu0 0.0
        %1111 = vmatpush1.msra.mxu0 %v1102
        %1112 = vmatprep.subr.mxu0 0.0
        %1113 = vmatpush1.msra.mxu0 %v1103
        %1114 = vmatprep.subr.mxu0 0.0
        %1115 = vmatpush1.msra.mxu0 %v1104
        %1116 = vmatprep.subr.mxu0 0.0
        %1117 = vmatpush1.msra.mxu0 %v1105
        %1118 = vmatprep.subr.mxu0 0.0
        %1119 = vmatpush1.msra.mxu0 %v1106
        %1120 = vmatprep.subr.mxu0 0.0
        %1121 = vmatpush1.msra.mxu0 %v1107
        %1122 = vmatprep.subr.mxu0 0.0
        %1123 = vmatpush1.msra.mxu0 %v1108
        %1124 = vmatprep.subr.mxu0 0.0
        %1125 = vmatpush1.msra.mxu0 %v1109
        %1126 = vmatprep.subr.mxu0 0.0
        %1127 = vmatpush1.msra.mxu0 0.0
        %1128 = vmatprep.subr.mxu0 0.0
        %1129 = vmatpush1.msra.mxu0 0.0
        %1130 = vmatprep.subr.mxu0 0.0
        %1131 = vmatpush1.msra.mxu0 0.0
        %1132 = vmatprep.subr.mxu0 0.0
        %1133 = vmatpush1.msra.mxu0 0.0
        %1134 = vmatprep.subr.mxu0 0.0
        %1135 = vmatpush1.msra.mxu0 0.0
        %1136 = vmatprep.subr.mxu0 0.0
        %1137 = vmatpush1.msra.mxu0 0.0
        %1138 = vmatprep.subr.mxu0 0.0
        %1139 = vmatpush1.msra.mxu0 0.0
        %1140 = vmatprep.subr.mxu0 0.0
        %1141 = vmatpush1.msra.mxu0 0.0
        %1142 = vmatprep.subr.mxu0 0.0
        %1143 = vmatpush1.msra.mxu0 0.0
        %1144 = vmatprep.subr.mxu0 0.0
        %1145 = vmatpush1.msra.mxu0 0.0
        %1146 = vmatprep.subr.mxu0 0.0
        %1147 = vmatpush1.msra.mxu0 0.0
        %1148 = vmatprep.subr.mxu0 0.0
        %1149 = vmatpush1.msra.mxu0 0.0
        %1150 = vmatprep.subr.mxu0 0.0
        %1151 = vmatpush1.msra.mxu0 0.0
        %1152 = vmatprep.subr.mxu0 0.0
        %1153 = vmatpush1.msra.mxu0 0.0
        %1154 = vmatprep.subr.mxu0 0.0
        %1155 = vmatpush1.msra.mxu0 0.0
        %1156 = vmatprep.subr.mxu0 0.0
        %1157 = vmatpush1.msra.mxu0 0.0
        %1158 = vmatprep.subr.mxu0 0.0
        %1159 = vmatpush1.msra.mxu0 0.0
        %1160 = vmatprep.subr.mxu0 0.0
        %1161 = vmatpush1.msra.mxu0 0.0
        %1162 = vmatprep.subr.mxu0 0.0
        %1163 = vmatpush1.msra.mxu0 0.0
        %1164 = vmatprep.subr.mxu0 0.0
        %1165 = vmatpush1.msra.mxu0 0.0
        %1166 = vmatprep.subr.mxu0 0.0
        %1167 = vmatpush1.msra.mxu0 0.0
        %1168 = vmatprep.subr.mxu0 0.0
        %1169 = vmatpush1.msra.mxu0 0.0
        %1170 = vmatprep.subr.mxu0 0.0
        %1171 = vmatpush1.msra.mxu0 0.0
        %1172 = vmatprep.subr.mxu0 0.0
        %1173 = vmatpush1.msra.mxu0 0.0
        %1174 = vmatprep.mubr.f32.mxu0 0.0
        %1175 = vmatmul.mubr.f32.gmra.mrb[0].mxu0 %v539
        %v1176 = vpop.f32.mrb[0].mxu0
        %v1177 = vadd.f32 %v500, %v1176
        %v1178 = vpop.f32.mrb[0].mxu0
        %1179 = vmatprep.mubr.f32.mxu0 0.0
        %1180 = vmatmul.mubr.f32.gmra.mrb[0].mxu0 %v542
        %v1181 = vpop.f32.mrb[0].mxu0
        %v1182 = vadd.f32 %v505, %v1181
        %v1183 = vpop.f32.mrb[0].mxu0
        %1184 = vmatprep.mubr.f32.mxu0 0.0
        %1185 = vmatmul.mubr.f32.gmra.mrb[0].mxu0 %v545
        %v1186 = vpop.f32.mrb[0].mxu0
        %v1187 = vadd.f32 %v510, %v1186
        %v1188 = vpop.f32.mrb[0].mxu0
        %1189 = vmatprep.mubr.f32.mxu0 0.0
        %1190 = vmatmul.mubr.f32.gmra.mrb[0].mxu0 %v548
        %v1191 = vpop.f32.mrb[0].mxu0
        %v1192 = vadd.f32 %v515, %v1191
        %v1193 = vpop.f32.mrb[0].mxu0
        %1194 = vmatprep.mubr.f32.mxu0 0.0
        %1195 = vmatmul.mubr.f32.gmra.mrb[0].mxu0 %v551
        %v1196 = vpop.f32.mrb[0].mxu0
        %v1197 = vadd.f32 %v520, %v1196
        %v1198 = vpop.f32.mrb[0].mxu0
        %1199 = vmatprep.mubr.f32.mxu0 0.0
        %1200 = vmatmul.mubr.f32.gmra.mrb[0].mxu0 %v554
        %v1201 = vpop.f32.mrb[0].mxu0
        %v1202 = vadd.f32 %v525, %v1201
        %v1203 = vpop.f32.mrb[0].mxu0
        %1204 = vmatprep.mubr.f32.mxu0 0.0
        %1205 = vmatmul.mubr.f32.gmra.mrb[0].mxu0 %v557
        %v1206 = vpop.f32.mrb[0].mxu0
        %v1207 = vadd.f32 %v530, %v1206
        %v1208 = vpop.f32.mrb[0].mxu0
        %1209 = vmatprep.mubr.f32.mxu0 0.0
        %1210 = vmatmul.mubr.f32.gmra.mrb[0].mxu0 %v560
        %v1211 = vpop.f32.mrb[0].mxu0
        %v1212 = vadd.f32 %v535, %v1211
        %v1213 = vpop.f32.mrb[0].mxu0
        %1214 = vdwg.mxu0
        %v1215 = vmul.f32 %v1177, 0.5
        %v1216 = vmul.f32 %v1182, 0.5
        %v1217 = vmul.f32 %v1187, 0.5
        %v1218 = vmul.f32 %v1192, 0.5
        %v1219 = vmul.f32 %v1197, 0.5
        %v1220 = vmul.f32 %v1202, 0.5
        %v1221 = vmul.f32 %v1207, 0.5
        %v1222 = vmul.f32 %v1212, 0.5
        %v1223 = vtanh.pop %v1215
        %v1224 = vtanh.pop %v1216
        %v1225 = vtanh.pop %v1217
        %v1226 = vtanh.pop %v1218
        %v1227 = vtanh.pop %v1219
        %v1228 = vtanh.pop %v1220
        %v1229 = vtanh.pop %v1221
        %v1230 = vtanh.pop %v1222
        %v1231 = vadd.f32 %v1223, 1.0
        %v1232 = vadd.f32 %v1224, 1.0
        %v1233 = vadd.f32 %v1225, 1.0
        %v1234 = vadd.f32 %v1226, 1.0
        %v1235 = vadd.f32 %v1227, 1.0
        %v1236 = vadd.f32 %v1228, 1.0
        %v1237 = vadd.f32 %v1229, 1.0
        %v1238 = vadd.f32 %v1230, 1.0
        %v1239 = vmul.f32 %v1231, 0.5
        %v1240 = vmul.f32 %v1232, 0.5
        %v1241 = vmul.f32 %v1233, 0.5
        %v1242 = vmul.f32 %v1234, 0.5
        %v1243 = vmul.f32 %v1235, 0.5
        %v1244 = vmul.f32 %v1236, 0.5
        %v1245 = vmul.f32 %v1237, 0.5
        %v1246 = vmul.f32 %v1238, 0.5
        %v1247 = vld [vmem:[%s5] sm:$0x3]
        %v1248 = vld [vmem:[%s6] sm:$0x3]
        %1250 = vset.pattern.permute.xlu0 0
        %1251 = vperm.xlu0 %1250, %v1248
        %v1252 = vpop.permute.xlu0 %1251
        %v1255 = vsel %vm537, %v1247, 0
        %1257 = vmatprep.subr.mxu0 0.0
        %1258 = vmatpush1.msra.mxu0 %v1239
        %1259 = vmatprep.subr.mxu0 0.0
        %1260 = vmatpush1.msra.mxu0 %v1240
        %1261 = vmatprep.subr.mxu0 0.0
        %1262 = vmatpush1.msra.mxu0 %v1241
        %1263 = vmatprep.subr.mxu0 0.0
        %1264 = vmatpush1.msra.mxu0 %v1242
        %1265 = vmatprep.subr.mxu0 0.0
        %1266 = vmatpush1.msra.mxu0 %v1243
        %1267 = vmatprep.subr.mxu0 0.0
        %1268 = vmatpush1.msra.mxu0 %v1244
        %1269 = vmatprep.subr.mxu0 0.0
        %1270 = vmatpush1.msra.mxu0 %v1245
        %1271 = vmatprep.subr.mxu0 0.0
        %1272 = vmatpush1.msra.mxu0 %v1246
        %1273 = vmatprep.subr.mxu0 0.0
        %1274 = vmatpush1.msra.mxu0 0.0
        %1275 = vmatprep.subr.mxu0 0.0
        %1276 = vmatpush1.msra.mxu0 0.0
        %1277 = vmatprep.subr.mxu0 0.0
        %1278 = vmatpush1.msra.mxu0 0.0
        %1279 = vmatprep.subr.mxu0 0.0
        %1280 = vmatpush1.msra.mxu0 0.0
        %1281 = vmatprep.subr.mxu0 0.0
        %1282 = vmatpush1.msra.mxu0 0.0
        %1283 = vmatprep.subr.mxu0 0.0
        %1284 = vmatpush1.msra.mxu0 0.0
        %1285 = vmatprep.subr.mxu0 0.0
        %1286 = vmatpush1.msra.mxu0 0.0
        %1287 = vmatprep.subr.mxu0 0.0
        %1288 = vmatpush1.msra.mxu0 0.0
        %1289 = vmatprep.subr.mxu0 0.0
        %1290 = vmatpush1.msra.mxu0 0.0
        %1291 = vmatprep.subr.mxu0 0.0
        %1292 = vmatpush1.msra.mxu0 0.0
        %1293 = vmatprep.subr.mxu0 0.0
        %1294 = vmatpush1.msra.mxu0 0.0
        %1295 = vmatprep.subr.mxu0 0.0
        %1296 = vmatpush1.msra.mxu0 0.0
        %1297 = vmatprep.subr.mxu0 0.0
        %1298 = vmatpush1.msra.mxu0 0.0
        %1299 = vmatprep.subr.mxu0 0.0
        %1300 = vmatpush1.msra.mxu0 0.0
        %1301 = vmatprep.subr.mxu0 0.0
        %1302 = vmatpush1.msra.mxu0 0.0
        %1303 = vmatprep.subr.mxu0 0.0
        %1304 = vmatpush1.msra.mxu0 0.0
        %1305 = vmatprep.subr.mxu0 0.0
        %1306 = vmatpush1.msra.mxu0 0.0
        %1307 = vmatprep.subr.mxu0 0.0
        %1308 = vmatpush1.msra.mxu0 0.0
        %1309 = vmatprep.subr.mxu0 0.0
        %1310 = vmatpush1.msra.mxu0 0.0
        %1311 = vmatprep.subr.mxu0 0.0
        %1312 = vmatpush1.msra.mxu0 0.0
        %1313 = vmatprep.subr.mxu0 0.0
        %1314 = vmatpush1.msra.mxu0 0.0
        %1315 = vmatprep.subr.mxu0 0.0
        %1316 = vmatpush1.msra.mxu0 0.0
        %1317 = vmatprep.subr.mxu0 0.0
        %1318 = vmatpush1.msra.mxu0 0.0
        %1319 = vmatprep.subr.mxu0 0.0
        %1320 = vmatpush1.msra.mxu0 0.0
        %1321 = vmatprep.mubr.f32.mxu0 0.0
        %1322 = vmatmul.mubr.f32.gmra.mrb[0].mxu0 %v1255
        %v1323 = vpop.f32.mrb[0].mxu0
        %v1324 = vadd.f32 %v1252, %v1323
        %v1325 = vpop.f32.mrb[0].mxu0
        %1326 = vdwg.mxu0
        %1327 = vst [vmem:[%s329] sm:$0x3] %v1324
        %p1328 = scmp.lt.s32.totalorder %s21, 2
        %s1329 = scalar_select %p1328, %s21, 2
        %s1330 = smul.addr %s1329, 2
        %s1331 = scalar_lea.vmem %s7, %s1330
        // Predicated region
        $region65: #{odenet_forward.1} parent=47 // pred_check
          %p1332 = pneg %p191
        $region66: #{odenet_forward.1} parent=47 // pred_check_branch
          %1334 = sbr.rel (%p1332) target = $region68
        $region67: #{odenet_forward.1} parent=47 // pred_region
          _
        $region68: #{odenet_forward.1} parent=47 // pred_fallthru
          _
      $region48: #{odenet_forward.1} parent=5 // pred_fallthru
        _
      %p1335 = scmp.le.s32.totalorder 2, %s16
      // Predicated region
      $region69: #{odenet_forward.1} parent=5 // pred_check
        %p1336 = pneg %p1335
      $region70: #{odenet_forward.1} parent=5 // pred_check_branch
        %1338 = sbr.rel (%p1336) target = $region72
      $region71: #{odenet_forward.1} parent=5 // pred_region
        %s1339 = ssub.s32 %s16, 2
        // Predicated region
        $region73: #{odenet_forward.1} parent=71 // pred_check
          %p1340 = pneg %p197
        $region74: #{odenet_forward.1} parent=71 // pred_check_branch
          %1342 = sbr.rel (%p1340) target = $region76
        $region75: #{odenet_forward.1} parent=71 // pred_region
          %p1343 = scmp.lt.s32.totalorder %s22, 2
          %s1344 = scalar_select %p1343, %s22, 2
          %s1345 = smul.addr %s1344, 2
          %s1346 = scalar_lea.vmem %s7, %s1345
        $region76: #{odenet_forward.1} parent=71 // pred_fallthru
          _
      $region72: #{odenet_forward.1} parent=5 // pred_fallthru
        _
    $region6: #{odenet_forward.1} parent=1 // loop_footer
      %s20 = sadd.s32 1, %s16
    $region7: #{odenet_forward.1} parent=1 // loop_footer_branch
      %15 = sbr.rel target = $region3
    $region8: #{odenet_forward.1} parent=1 // loop_exit
      _
    %1347 = vsyncpa [#allocation3], 1
    %s1348 = scalar_lea.sflag [#allocation3], 1
    %1349 = vsyncpa %s1348, 1
    %1350 = vsyncpa [#allocation5], 1
    %1351 = vsyncpa [#allocation8], 1

</llo_original>
